<compile_context>
chip_gen: v7x
topology: tpu7x:2x2x1
jax: 0.10.0
libtpu: 0.0.40
codegen_flags: <defaults>
</compile_context>

<pallas_src>
import functools

import jax
import jax.numpy as jnp
from jax.experimental import pallas as pl
from jax.experimental.pallas import tpu as pltpu

LEAKY_SLOPE = 0.1
BN_EPS = 1e-5
MAX_TK = 4608  # largest K in this net (512 * 3 * 3); full-K tiles everywhere


# --------------------------------------------------------------------------------------
# Fused (matmul + bias + LeakyReLU + optional residual) Pallas kernel
# --------------------------------------------------------------------------------------
def _fused_matmul_kernel(*refs, act, has_residual, nk):
    if has_residual:
        x_ref, w_ref, b_ref, r_ref, o_ref = refs
    else:
        x_ref, w_ref, b_ref, o_ref = refs
        r_ref = None

    if nk == 1:
        # single k step: compute + epilogue, one lane-dense store
        y = jnp.dot(x_ref[...], w_ref[...], preferred_element_type=jnp.float32)
        y = y + b_ref[...]                                   # folded BN bias / conv bias
        if act:
            y = jnp.where(y > 0, y, LEAKY_SLOPE * y)         # LeakyReLU(0.1)
        if has_residual:
            y = y + r_ref[...]
        o_ref[...] = y
    else:
        # output block is resident across k (index_map ignores k) -> use it as accumulator
        k = pl.program_id(2)

        @pl.when(k == 0)
        def _():
            o_ref[...] = jnp.zeros_like(o_ref)

        o_ref[...] += jnp.dot(x_ref[...], w_ref[...],
                              preferred_element_type=jnp.float32)

        @pl.when(k == nk - 1)
        def _():
            y = o_ref[...] + b_ref[...]
            if act:
                y = jnp.where(y > 0, y, LEAKY_SLOPE * y)
            if has_residual:
                y = y + r_ref[...]
            o_ref[...] = y


def _round_up(x, m):
    return (x + m - 1) // m * m


def _fused_matmul(xm, wm, bias, rm, act):
    """xm:(M,K) wm:(K,N) [scale already folded] bias:(N,) rm:(M,N) or None -> (M,N) f32."""
    M, K = xm.shape
    _, N = wm.shape
    has_residual = rm is not None

    # ---- tile plan -------------------------------------------------------------------
    if M <= 256:
        Mp = _round_up(M, 8)
        tm = Mp
    else:
        tm = 256
        Mp = _round_up(M, 256)

    Np = _round_up(N, 128)
    if (Mp // tm) == 1 and Np == 256:
        tn = 128                      # >=2 parallel tiles so v7x's 2 TCs both get work
    elif Np >= 256 and Np % 256 == 0:
        tn = 256                      # matches v6e/v7x 256x256 MXU tile
    else:
        tn = 128 if Np > 128 else Np

    if K < 128:
        Kp = _round_up(K, 8)          # small-K layer (e.g. stem K=27): pad to 8 only
        tk = Kp
    elif K <= MAX_TK:
        Kp = _round_up(K, 128)
        tk = Kp                       # full-K: no k loop, no per-step overhead
    else:
        tk = 512
        Kp = _round_up(K, 512)
    nk = Kp // tk

    # ---- operand prep: bf16 GEMM inputs, f32 bias/residual ----------------------------
    xm_p = jnp.pad(xm, ((0, Mp - M), (0, Kp - K))).astype(jnp.bfloat16)
    wm_p = jnp.pad(wm, ((0, Kp - K), (0, Np - N))).astype(jnp.bfloat16)
    b_p = jnp.pad(bias, (0, Np - N)).reshape(1, Np).astype(jnp.float32)

    in_specs = [
        pl.BlockSpec((tm, tk), lambda i, j, k: (i, k)),   # im2col activations (bf16)
        pl.BlockSpec((tk, tn), lambda i, j, k: (k, j)),   # scale-folded weights (bf16)
        pl.BlockSpec((1, tn), lambda i, j, k: (0, j)),    # per-channel bias (f32)
    ]
    args = [xm_p, wm_p, b_p]
    if has_residual:
        r_p = jnp.pad(rm, ((0, Mp - M), (0, Np - N))).astype(jnp.float32)
        in_specs.append(pl.BlockSpec((tm, tn), lambda i, j, k: (i, j)))
        args.append(r_p)

    kernel = functools.partial(_fused_matmul_kernel, act=act,
                               has_residual=has_residual, nk=nk)
    out = pl.pallas_call(
        kernel,
        out_shape=jax.ShapeDtypeStruct((Mp, Np), jnp.float32),
        grid_spec=pltpu.PrefetchScalarGridSpec(
            num_scalar_prefetch=0,
            grid=(Mp // tm, Np // tn, nk),
            in_specs=in_specs,
            out_specs=pl.BlockSpec((tm, tn), lambda i, j, k: (i, j)),
        ),
        compiler_params=pltpu.CompilerParams(
            dimension_semantics=("parallel", "parallel", "arbitrary")),
    )(*args)
    return out[:M, :N]


@functools.partial(jax.jit, static_argnames=("stride", "padding", "act"))
def conv2d_bn_act(x, w, scale, bias, residual, stride, padding, act):
    """NHWC conv (stride/pad) + folded BN + LeakyReLU + optional residual (fused GEMM)."""
    B, H, W, Cin = x.shape
    Cout, _, kh, kw = w.shape
    Ho = (H + 2 * padding - kh) // stride + 1
    Wo = (W + 2 * padding - kw) // stride + 1

    if kh == 1 and kw == 1 and stride == 1 and padding == 0:
        xm = x.reshape(B * H * W, Cin)                      # 1x1 conv: no im2col needed
    else:
        xp = jnp.pad(x, ((0, 0), (padding, padding), (padding, padding), (0, 0)))
        cols = [xp[:, di:di + stride * Ho:stride, dj:dj + stride * Wo:stride, :]
                for di in range(kh) for dj in range(kw)]
        xm = jnp.concatenate(cols, axis=-1).reshape(B * Ho * Wo, kh * kw * Cin)

    # weight columns ordered (kh, kw, cin) to match im2col; fold BN scale into weights
    wm = w.transpose(2, 3, 1, 0).reshape(kh * kw * Cin, Cout) * scale[None, :]
    rm = residual.reshape(B * Ho * Wo, Cout) if residual is not None else None

    out = _fused_matmul(xm, wm, bias, rm, act)
    return out.reshape(B, Ho, Wo, Cout)


def cbl(x, p, stride=1, padding=0, act=True, residual=None):
    return conv2d_bn_act(x, p["w"], p["scale"], p["bias"], residual,
                         stride=stride, padding=padding, act=act)


def upsample2x(x):
    # nn.Upsample(scale_factor=2, mode='nearest'), NHWC; pure layout glue
    return jnp.repeat(jnp.repeat(x, 2, axis=1), 2, axis=2)


# --------------------------------------------------------------------------------------
# Deterministic parameter construction (synthetic; BN folded in eval mode)
# --------------------------------------------------------------------------------------
def make_cbl(key, cin, cout, ksize):
    kw_, kg, kb, km, kv = jax.random.split(key, 5)
    fan_in = cin * ksize * ksize
    w = jax.random.normal(kw_, (cout, cin, ksize, ksize), jnp.float32) * (2.0 / fan_in) ** 0.5
    gamma = 1.0 + 0.1 * jax.random.normal(kg, (cout,), jnp.float32)
    beta = 0.1 * jax.random.normal(kb, (cout,), jnp.float32)
    mean = 0.1 * jax.random.normal(km, (cout,), jnp.float32)
    var = 1.0 + 0.5 * jax.random.uniform(kv, (cout,), jnp.float32)
    scale = gamma * jax.lax.rsqrt(var + BN_EPS)
    bias = beta - mean * scale
    return {"w": w, "scale": scale, "bias": bias}


def make_head(key, cin, cout):
    # plain Conv2d 1x1 with bias, no BN, no activation
    kw_, kb = jax.random.split(key)
    w = jax.random.normal(kw_, (cout, cin, 1, 1), jnp.float32) * (2.0 / cin) ** 0.5
    b = 0.1 * jax.random.normal(kb, (cout,), jnp.float32)
    return {"w": w, "scale": jnp.ones((cout,), jnp.float32), "bias": b}


def init_darknet53(key):
    n_keys = 1 + 5 + 2 * (1 + 2 + 8 + 8 + 4)
    keys = iter(jax.random.split(key, n_keys))
    params = {"conv1": make_cbl(next(keys), 3, 32, 3), "stages": []}
    cin = 32
    for n_blocks, cout in zip([1, 2, 8, 8, 4], [64, 128, 256, 512, 1024]):
        stage = {"down": make_cbl(next(keys), cin, cout, 3), "blocks": []}
        for _ in range(n_blocks):
            stage["blocks"].append({
                "c1": make_cbl(next(keys), cout, cout // 2, 1),
                "c2": make_cbl(next(keys), cout // 2, cout, 3),
            })
        params["stages"].append(stage)
        cin = cout
    return params


def darknet53_forward(params, x):
    x = cbl(x, params["conv1"], stride=1, padding=1)
    feats = []
    for stage in params["stages"]:
        x = cbl(x, stage["down"], stride=2, padding=1)
        for blk in stage["blocks"]:
            y = cbl(x, blk["c1"], stride=1, padding=0)
            x = cbl(y, blk["c2"], stride=1, padding=1, residual=x)  # out = act(bn(conv)) + x
        feats.append(x)
    # (out3, out4, out5) = (256ch @ /8, 512ch @ /16, 1024ch @ /32)
    return feats[2], feats[3], feats[4]


def init_dbl(key, n, in_c, out_c, ks, ss, ps):
    keys = jax.random.split(key, n)
    layers = []
    ci, co = in_c, out_c
    for i in range(n):
        layers.append({"p": make_cbl(keys[i], ci, co, ks[i]), "s": ss[i], "pad": ps[i]})
        ci, co = co, ci  # alternate widths (standard DBL stack)
    return layers


def dbl_forward(layers, x):
    for l in layers:
        x = cbl(x, l["p"], stride=l["s"], padding=l["pad"])
    return x


def init_yolo_v3(key, anchors_mask, num_classes):
    keys = jax.random.split(key, 12)
    no = num_classes + 5
    return {
        "backbone": init_darknet53(keys[0]),
        "branch1_DBL5": init_dbl(keys[1], 5, 1024, 512, [1, 3, 1, 3, 1], [1] * 5, [0, 1, 0, 1, 0]),
        "branch2_DBL5": init_dbl(keys[2], 5, 768, 256, [1, 3, 1, 3, 1], [1] * 5, [0, 1, 0, 1, 0]),
        "branch3_DBL5": init_dbl(keys[3], 5, 384, 128, [1, 3, 1, 3, 1], [1] * 5, [0, 1, 0, 1, 0]),
        "DBL_up1": init_dbl(keys[4], 1, 512, 256, [1], [1], [0]),
        "DBL_up2": init_dbl(keys[5], 1, 256, 128, [1], [1], [0]),
        "last1_dbl": init_dbl(keys[6], 1, 512, 1024, [3], [1], [1]),
        "last1_head": make_head(keys[7], 1024, len(anchors_mask[0]) * no),
        "last2_dbl": init_dbl(keys[8], 1, 256, 512, [3], [1], [1]),
        "last2_head": make_head(keys[9], 512, len(anchors_mask[1]) * no),
        "last3_dbl": init_dbl(keys[10], 1, 128, 256, [3], [1], [1]),
        "last3_head": make_head(keys[11], 256, len(anchors_mask[2]) * no),
    }


def yolo_v3_forward(params, x_nchw):
    x = x_nchw.transpose(0, 2, 3, 1)  # NCHW -> NHWC once; whole net runs channels-last

    x2, x1, x0 = darknet53_forward(params["backbone"], x)

    x0 = dbl_forward(params["branch1_DBL5"], x0)
    out0 = dbl_forward(params["last1_dbl"], x0)
    out0 = cbl(out0, params["last1_head"], stride=1, padding=0, act=False)

    x1_merge = upsample2x(dbl_forward(params["DBL_up1"], x0))
    merge1 = jnp.concatenate([x1_merge, x1], axis=-1)
    merge1 = dbl_forward(params["branch2_DBL5"], merge1)
    out1 = dbl_forward(params["last2_dbl"], merge1)
    out1 = cbl(out1, params["last2_head"], stride=1, padding=0, act=False)

    x2_merge = upsample2x(dbl_forward(params["DBL_up2"], merge1))
    merge2 = jnp.concatenate([x2_merge, x2], axis=-1)
    merge2 = dbl_forward(params["branch3_DBL5"], merge2)
    out2 = dbl_forward(params["last3_dbl"], merge2)
    out2 = cbl(out2, params["last3_head"], stride=1, padding=0, act=False)

    # NHWC -> NCHW only at the three head outputs
    return (out0.transpose(0, 3, 1, 2),
            out1.transpose(0, 3, 1, 2),
            out2.transpose(0, 3, 1, 2))


if __name__ == "__main__":
    anchors_mask = [[6, 7, 8], [3, 4, 5], [0, 1, 2]]
    num_classes = 2
    no = len(anchors_mask[0]) * (num_classes + 5)  # 21

    key = jax.random.PRNGKey(0)
    kp, kx = jax.random.split(key)
    params = init_yolo_v3(kp, anchors_mask, num_classes)

    # smallest legal YOLOv3 input: spatial divisible by 32
    x = jax.random.normal(kx, (1, 3, 32, 32), jnp.float32)

    out0, out1, out2 = yolo_v3_forward(params, x)
    (out0, out1, out2) = jax.block_until_ready((out0, out1, out2))

    assert out0.shape == (1, no, 1, 1), out0.shape
    assert out1.shape == (1, no, 2, 2), out1.shape
    assert out2.shape == (1, no, 4, 4), out2.shape
    assert out0.dtype == out1.dtype == out2.dtype == jnp.float32
    assert all(bool(jnp.all(jnp.isfinite(o))) for o in (out0, out1, out2))

    print("KERNEL_OK")
</pallas_src>

<mosaic_0001>
module attributes {stable_mosaic.version = 11 : i64} {
  func.func @_fused_matmul_kernel(%arg0: i32, %arg1: i32, %arg2: i32, %arg3: memref<256x32xbf16, #tpu.memory_space<vmem>>, %arg4: memref<32x128xbf16, #tpu.memory_space<vmem>>, %arg5: memref<1x128xf32, #tpu.memory_space<vmem>>, %arg6: memref<256x128xf32, #tpu.memory_space<vmem>>) attributes {dimension_semantics = [#tpu.dimension_semantics<parallel>, #tpu.dimension_semantics<parallel>, #tpu.dimension_semantics<arbitrary>], iteration_bounds = array<i64: 4, 1, 1>, scalar_prefetch = 0 : i64, scratch_operands = 0 : i64, tpu.core_type = #tpu.core_type<tc>, window_params = [{transform_indices = @transform_0, window_bounds = array<i64: 256, 32>}, {transform_indices = @transform_1, window_bounds = array<i64: 32, 128>}, {transform_indices = @transform_2, window_bounds = array<i64: 1, 128>}, {transform_indices = @transform_3, window_bounds = array<i64: 256, 128>}]} {
    %c0 = arith.constant 0 : index
    %c0_0 = arith.constant 0 : index
    %0 = vector.load %arg3[%c0, %c0_0] : memref<256x32xbf16, #tpu.memory_space<vmem>>, vector<256x32xbf16>
    %c0_1 = arith.constant 0 : index
    %c0_2 = arith.constant 0 : index
    %1 = vector.load %arg4[%c0_1, %c0_2] : memref<32x128xbf16, #tpu.memory_space<vmem>>, vector<32x128xbf16>
    %cst = arith.constant dense<0.000000e+00> : vector<256x128xf32>
    %2 = tpu.matmul %0, %1, %cst {dimension_numbers = #tpu.dot_dimension_numbers<[1], [0], [0], [1], [0, 0, 1, 1], [], []>} : vector<256x32xbf16>, vector<32x128xbf16>, vector<256x128xf32> -> vector<256x128xf32>
    %c0_3 = arith.constant 0 : index
    %c0_4 = arith.constant 0 : index
    %3 = vector.load %arg5[%c0_3, %c0_4] : memref<1x128xf32, #tpu.memory_space<vmem>>, vector<1x128xf32>
    %4 = vector.broadcast %3 : vector<1x128xf32> to vector<256x128xf32>
    %5 = arith.addf %2, %4 : vector<256x128xf32>
    %cst_5 = arith.constant 0.000000e+00 : f32
    %6 = vector.broadcast %cst_5 : f32 to vector<256x128xf32>
    %7 = arith.cmpf ogt, %5, %6 : vector<256x128xf32>
    %cst_6 = arith.constant 1.000000e-01 : f32
    %8 = vector.broadcast %cst_6 : f32 to vector<256x128xf32>
    %9 = arith.mulf %8, %5 : vector<256x128xf32>
    %10 = arith.select %7, %5, %9 : vector<256x128xi1>, vector<256x128xf32>
    %c0_7 = arith.constant 0 : index
    %c0_8 = arith.constant 0 : index
    %11 = vector.load %arg6[%c0_7, %c0_8] : memref<256x128xf32, #tpu.memory_space<vmem>>, vector<256x128xf32>
    tpu.vector_store %arg6[%c0_7, %c0_8], %10 {strides = array<i32>} : memref<256x128xf32, #tpu.memory_space<vmem>>, vector<256x128xf32>,
    return
  }
  func.func @transform_0(%arg0: i32, %arg1: i32, %arg2: i32) -> (i32, i32) {
    %c0_i32 = arith.constant 0 : i32
    return %arg0, %arg2 : i32, i32
  }
  func.func @transform_1(%arg0: i32, %arg1: i32, %arg2: i32) -> (i32, i32) {
    %c0_i32 = arith.constant 0 : i32
    return %arg2, %arg1 : i32, i32
  }
  func.func @transform_2(%arg0: i32, %arg1: i32, %arg2: i32) -> (i32, i32) {
    %c0_i32 = arith.constant 0 : i32
    %c0_i32_0 = arith.constant 0 : i32
    return %c0_i32, %arg1 : i32, i32
  }
  func.func @transform_3(%arg0: i32, %arg1: i32, %arg2: i32) -> (i32, i32) {
    %c0_i32 = arith.constant 0 : i32
    return %arg0, %arg1 : i32, i32
  }
}

</mosaic_0001>

<llo_original>
// kernel: conv2d_bn_act.1
$region0: #{conv2d_bn_act.1}
  #allocation0 [shape = 'u32[]', space=smem, size = 0x4, offset = 0x4, fixed_abs, tag = 'smem constant byte address 0x4 - core index']
  #allocation1 [shape = 'u32[144,128]{1,0:T(1,128)}', space=vmem, size = 0x12000, scoped, tag = 'internal scratch']
  %s0 = inlined_call_operand.vmem [shape: bf16[1024,32], index: 0, kind: input, shape index: {}]
  %s1 = inlined_call_operand.vmem [shape: bf16[32,128], index: 1, kind: input, shape index: {}]
  %s2 = inlined_call_operand.vmem [shape: f32[1,128], index: 2, kind: input, shape index: {}]
  %s3 = inlined_call_operand.hbm [shape: f32[1024,128], index: 3, kind: output, shape index: {}]
  %s4 = sld [smem:[#allocation0]]
  $region45: #{conv2d_bn_act.1} parent=0
    _
  %s6 = ssub.s32 1, %s4
  %s7 = scalar_select 0, %s6, %s4
  $region1: #{conv2d_bn_act.1} parent=0
    #allocation2 [shape = 'u8[262144]{0}', space=vmem, size = 0x40000, scoped, tag = 'output window, operand 0']
    #allocation3 [shape = 's32[2]{0}', space=sflag, size = 0x8, scoped, tag = 'scoped memory for conv2d_bn_act.1']
    %8 = vsyncpa [#allocation3], 0
    %s9 = scalar_lea.sflag [#allocation3], 1
    %10 = vsyncpa %s9, 0
    loop: start=0, step=1, limit=6
    $region2: #{conv2d_bn_act.1} parent=1 // loop_pre_header
      _
    $region3: #{conv2d_bn_act.1} parent=1 // loop_header
      %s12 = sphi 0, %s16
      %p13 = scmp.ge.s32.totalorder %s12, 6
      %s19 = sphi 0, %s38
      %s20 = sphi 0, %s34
      %s21 = sphi 0, %s30
      %s22 = sphi 0, %s19
      %s23 = sphi 0, %s20
      %s24 = sphi 0, %s21
      %s25 = sphi 0, %s22
      %s26 = sphi 0, %s23
      %s27 = sphi 0, %s24
      %s43 = sphi 0, %s45
      %s46 = sphi 0, %s43
      %s47 = sphi 0, %s46
      %s63 = sphi 0, %s47
      %s71 = sphi 0, %s73
      %s74 = sphi 0, %s71
      %s75 = sphi 0, %s74
      %s91 = sphi 0, %s75
      %s97 = sphi 0, %s99
      %s100 = sphi 0, %s97
      %s101 = sphi 0, %s100
      %s117 = sphi 0, %s101
      %s125 = sphi 0, %s127
      %s128 = sphi 0, %s125
      %s129 = sphi 0, %s128
      %s145 = sphi 0, %s129
    $region4: #{conv2d_bn_act.1} parent=1 // loop_header_branch
      %15 = sbr.rel (%p13) target = $region8
    $region5: #{conv2d_bn_act.1} parent=1 // loop_body
      %s17 = ssub.s32 %s12, 1
      %s18 = ssub.s32 %s12, 2
      %s28 = sadd.s32 1, %s21
      %p29 = scmp.ge.s32.totalorder %s28, 1
      %s30 = scalar_select %p29, 0, %s28
      %s31 = sadd.s32 1, %s20
      %s32 = scalar_select %p29, %s31, %s20
      %p33 = scmp.ge.s32.totalorder %s32, 1
      %s34 = scalar_select %p33, 0, %s32
      %s35 = sadd.s32 1, %s19
      %s36 = scalar_select %p33, %s35, %s19
      %p37 = scmp.ge.s32.totalorder %s36, 4
      %s38 = scalar_select %p37, 0, %s36
      %s39 = ssub.s32 %s19, %s38
      %s40 = ssub.s32 %s21, %s30
      %s41 = sor.u32 %s39, %s40
      %p42 = scmp.eq.s32.totalorder %s41, 0
      %s44 = sadd.s32 %s43, 1
      %s45 = scalar_select %p42, %s43, %s44
      %p48 = pneg %p42
      %p49 = scmp.eq.s32.totalorder %s12, 3
      %p50 = por %p48, %p49
      %p51 = scmp.ne.s32.totalorder %s43, %s46
      %p52 = scmp.eq.s32.totalorder %s12, 0
      %p53 = por %p51, %p52
      %p54 = scmp.ne.s32.totalorder %s43, %s46
      %p55 = scmp.eq.s32.totalorder %s17, 3
      %p56 = por %p54, %p55
      %p57 = scmp.ne.s32.totalorder %s46, %s47
      %p58 = scmp.eq.s32.totalorder %s17, 0
      %p59 = por %p57, %p58
      %p60 = scmp.ne.s32.totalorder %s46, %s47
      %p61 = scmp.eq.s32.totalorder %s18, 3
      %p62 = por %p60, %p61
      %p64 = scmp.ne.s32.totalorder %s47, %s63
      %p65 = scmp.eq.s32.totalorder %s18, 0
      %p66 = por %p64, %p65
      %s67 = ssub.s32 %s21, %s30
      %s68 = ssub.s32 %s20, %s34
      %s69 = sor.u32 %s67, %s68
      %p70 = scmp.eq.s32.totalorder %s69, 0
      %s72 = sadd.s32 %s71, 1
      %s73 = scalar_select %p70, %s71, %s72
      %p76 = pneg %p70
      %p77 = scmp.eq.s32.totalorder %s12, 3
      %p78 = por %p76, %p77
      %p79 = scmp.ne.s32.totalorder %s71, %s74
      %p80 = scmp.eq.s32.totalorder %s12, 0
      %p81 = por %p79, %p80
      %p82 = scmp.ne.s32.totalorder %s71, %s74
      %p83 = scmp.eq.s32.totalorder %s17, 3
      %p84 = por %p82, %p83
      %p85 = scmp.ne.s32.totalorder %s74, %s75
      %p86 = scmp.eq.s32.totalorder %s17, 0
      %p87 = por %p85, %p86
      %p88 = scmp.ne.s32.totalorder %s74, %s75
      %p89 = scmp.eq.s32.totalorder %s18, 3
      %p90 = por %p88, %p89
      %p92 = scmp.ne.s32.totalorder %s75, %s91
      %p93 = scmp.eq.s32.totalorder %s18, 0
      %p94 = por %p92, %p93
      %s95 = ssub.s32 %s20, %s34
      %p96 = scmp.eq.s32.totalorder %s95, 0
      %s98 = sadd.s32 %s97, 1
      %s99 = scalar_select %p96, %s97, %s98
      %p102 = pneg %p96
      %p103 = scmp.eq.s32.totalorder %s12, 3
      %p104 = por %p102, %p103
      %p105 = scmp.ne.s32.totalorder %s97, %s100
      %p106 = scmp.eq.s32.totalorder %s12, 0
      %p107 = por %p105, %p106
      %p108 = scmp.ne.s32.totalorder %s97, %s100
      %p109 = scmp.eq.s32.totalorder %s17, 3
      %p110 = por %p108, %p109
      %p111 = scmp.ne.s32.totalorder %s100, %s101
      %p112 = scmp.eq.s32.totalorder %s17, 0
      %p113 = por %p111, %p112
      %p114 = scmp.ne.s32.totalorder %s100, %s101
      %p115 = scmp.eq.s32.totalorder %s18, 3
      %p116 = por %p114, %p115
      %p118 = scmp.ne.s32.totalorder %s101, %s117
      %p119 = scmp.eq.s32.totalorder %s18, 0
      %p120 = por %p118, %p119
      %s121 = ssub.s32 %s19, %s38
      %s122 = ssub.s32 %s20, %s34
      %s123 = sor.u32 %s121, %s122
      %p124 = scmp.eq.s32.totalorder %s123, 0
      %s126 = sadd.s32 %s125, 1
      %s127 = scalar_select %p124, %s125, %s126
      %p130 = pneg %p124
      %p131 = scmp.eq.s32.totalorder %s12, 3
      %p132 = por %p130, %p131
      %p133 = scmp.ne.s32.totalorder %s125, %s128
      %p134 = scmp.eq.s32.totalorder %s12, 0
      %p135 = por %p133, %p134
      %p136 = scmp.ne.s32.totalorder %s125, %s128
      %p137 = scmp.eq.s32.totalorder %s17, 3
      %p138 = por %p136, %p137
      %p139 = scmp.ne.s32.totalorder %s128, %s129
      %p140 = scmp.eq.s32.totalorder %s17, 0
      %p141 = por %p139, %p140
      %p142 = scmp.ne.s32.totalorder %s128, %s129
      %p143 = scmp.eq.s32.totalorder %s18, 3
      %p144 = por %p142, %p143
      %p146 = scmp.ne.s32.totalorder %s129, %s145
      %p147 = scmp.eq.s32.totalorder %s18, 0
      %p148 = por %p146, %p147
      %p149 = scmp.le.s32.totalorder 1, %s12
      %p150 = scmp.lt.s32.totalorder %s12, 5
      %p151 = pnand %p149, %p150
      %p152 = pneg %p151
      // Predicated region
      $region9: #{conv2d_bn_act.1} parent=5 // pred_check
        _
      $region10: #{conv2d_bn_act.1} parent=5 // pred_check_branch
        %154 = sbr.rel (%p151) target = $region12
      $region11: #{conv2d_bn_act.1} parent=5 // pred_region
        %s155 = ssub.s32 %s12, 1
        // Predicated region
        $region13: #{conv2d_bn_act.1} parent=11 // pred_check
          %p156 = pneg %p87
        $region14: #{conv2d_bn_act.1} parent=11 // pred_check_branch
          %158 = sbr.rel (%p156) target = $region16
        $region15: #{conv2d_bn_act.1} parent=11 // pred_region
          %s159 = smul.u32 4, %s24
          %p160 = scmp.lt.s32.totalorder %s159, 3
          %s161 = scalar_select %p160, %s159, 3
          %p162 = scmp.lt.s32.totalorder %s23, 0
          %s163 = scalar_select %p162, %s23, 0
          %s164 = sadd.s32 %s163, %s161
          %s165 = smul.addr %s164, 4
          %s166 = scalar_lea.vmem %s1, %s165
          %s167 = smul.u32 4, %s24
        $region16: #{conv2d_bn_act.1} parent=11 // pred_fallthru
          _
        // Predicated region
        $region17: #{conv2d_bn_act.1} parent=11 // pred_check
          %p168 = pneg %p113
        $region18: #{conv2d_bn_act.1} parent=11 // pred_check_branch
          %170 = sbr.rel (%p168) target = $region20
        $region19: #{conv2d_bn_act.1} parent=11 // pred_region
          %p171 = scmp.lt.s32.totalorder %s23, 0
          %s172 = scalar_select %p171, %s23, 0
          %s173 = scalar_lea.vmem %s2, %s172
        $region20: #{conv2d_bn_act.1} parent=11 // pred_fallthru
          _
      $region12: #{conv2d_bn_act.1} parent=5 // pred_fallthru
        _
      %p174 = scmp.lt.s32.totalorder %s12, 4
      // Predicated region
      $region21: #{conv2d_bn_act.1} parent=5 // pred_check
        %p175 = pneg %p174
      $region22: #{conv2d_bn_act.1} parent=5 // pred_check_branch
        %177 = sbr.rel (%p175) target = $region24
      $region23: #{conv2d_bn_act.1} parent=5 // pred_region
        // Predicated region
        $region25: #{conv2d_bn_act.1} parent=23 // pred_check
          %p178 = pneg %p53
        $region26: #{conv2d_bn_act.1} parent=23 // pred_check_branch
          %180 = sbr.rel (%p178) target = $region28
        $region27: #{conv2d_bn_act.1} parent=23 // pred_region
          %s181 = smul.u32 32, %s19
          %p182 = scmp.lt.s32.totalorder %s181, 127
          %s183 = scalar_select %p182, %s181, 127
          %p184 = scmp.lt.s32.totalorder %s21, 0
          %s185 = scalar_select %p184, %s21, 0
          %s186 = sadd.s32 %s185, %s183
          %s187 = smul.addr %s186, 4
          %s188 = scalar_lea.vmem %s0, %s187
          %s189 = smul.u32 32, %s19
        $region28: #{conv2d_bn_act.1} parent=23 // pred_fallthru
          _
      $region24: #{conv2d_bn_act.1} parent=5 // pred_fallthru
        _
      %p190 = scmp.le.s32.totalorder 1, %s12
      %p191 = scmp.lt.s32.totalorder %s12, 5
      %p192 = pnand %p190, %p191
      %p193 = pneg %p192
      // Predicated region
      $region29: #{conv2d_bn_act.1} parent=5 // pred_check
        _
      $region30: #{conv2d_bn_act.1} parent=5 // pred_check_branch
        %195 = sbr.rel (%p192) target = $region32
      $region31: #{conv2d_bn_act.1} parent=5 // pred_region
        %s196 = ssub.s32 %s12, 1
        %s197 = smul.u32 32, %s22
        %p198 = scmp.lt.s32.totalorder %s197, 127
        %s199 = scalar_select %p198, %s197, 127
        %p200 = scmp.lt.s32.totalorder %s24, 0
        %s201 = scalar_select %p200, %s24, 0
        %s202 = sadd.s32 %s201, %s199
        %s203 = smul.addr %s202, 4
        %s204 = scalar_lea.vmem %s0, %s203
        %p205 = pneg %p59
        %p206 = pneg %p56
        %s207 = smul.u32 4, %s24
        %p208 = scmp.lt.s32.totalorder %s207, 3
        %s209 = scalar_select %p208, %s207, 3
        %p210 = scmp.lt.s32.totalorder %s23, 0
        %s211 = scalar_select %p210, %s23, 0
        %s212 = sadd.s32 %s211, %s209
        %s213 = smul.addr %s212, 4
        %s214 = scalar_lea.vmem %s1, %s213
        %p215 = pneg %p87
        %p216 = pneg %p84
        %p217 = scmp.lt.s32.totalorder %s23, 0
        %s218 = scalar_select %p217, %s23, 0
        %s219 = scalar_lea.vmem %s2, %s218
        %p220 = pneg %p113
        %p221 = pneg %p110
        %p222 = pneg %p141
        %p223 = pneg %p138
        %s224 = sand.u32 %s128, 1
        %s225 = scalar_lea.sflag [#allocation3], %s224
        %s226 = sand.u32 %s128, 1
        %s227 = smul.addr %s226, 256
        %s228 = scalar_lea.vmem [#allocation2], %s227
        %s229 = smul.u32 32, %s22
        %p230 = scmp.lt.s32.totalorder %s229, 127
        %s231 = scalar_select %p230, %s229, 127
        %p232 = scmp.lt.s32.totalorder %s24, 0
        %s233 = scalar_select %p232, %s24, 0
        %s234 = sadd.s32 %s233, %s231
        %s235 = smul.addr %s234, 4
        %s236 = scalar_lea.vmem %s0, %s235
        %s237 = smul.u32 32, %s22
        %s238 = smul.u32 4, %s24
        %p239 = scmp.lt.s32.totalorder %s238, 3
        %s240 = scalar_select %p239, %s238, 3
        %p241 = scmp.lt.s32.totalorder %s23, 0
        %s242 = scalar_select %p241, %s23, 0
        %s243 = sadd.s32 %s242, %s240
        %s244 = smul.addr %s243, 4
        %s245 = scalar_lea.vmem %s1, %s244
        %s246 = smul.u32 4, %s24
        %p247 = scmp.lt.s32.totalorder %s23, 0
        %s248 = scalar_select %p247, %s23, 0
        %s249 = scalar_lea.vmem %s2, %s248
        %s250 = smul.u32 32, %s22
        %v252 = vld [vmem:[%s236] sm:$0xf]
        %v253 = vld [vmem:[%s236 + $0x4] sm:$0xf]
        %v254 = vld [vmem:[%s236 + $0x8] sm:$0xf]
        %v255 = vld [vmem:[%s236 + $0xc] sm:$0xf]
        %v256 = vld [vmem:[%s236 + $0x10] sm:$0xf]
        %v257 = vld [vmem:[%s236 + $0x14] sm:$0xf]
        %v258 = vld [vmem:[%s236 + $0x18] sm:$0xf]
        %v259 = vld [vmem:[%s236 + $0x1c] sm:$0xf]
        %v260 = vld [vmem:[%s236 + $0x20] sm:$0xf]
        %v261 = vld [vmem:[%s236 + $0x24] sm:$0xf]
        %v262 = vld [vmem:[%s236 + $0x28] sm:$0xf]
        %v263 = vld [vmem:[%s236 + $0x2c] sm:$0xf]
        %v264 = vld [vmem:[%s236 + $0x30] sm:$0xf]
        %v265 = vld [vmem:[%s236 + $0x34] sm:$0xf]
        %v266 = vld [vmem:[%s236 + $0x38] sm:$0xf]
        %v267 = vld [vmem:[%s236 + $0x3c] sm:$0xf]
        %v268 = vld [vmem:[%s236 + $0x40] sm:$0xf]
        %v269 = vld [vmem:[%s236 + $0x44] sm:$0xf]
        %v270 = vld [vmem:[%s236 + $0x48] sm:$0xf]
        %v271 = vld [vmem:[%s236 + $0x4c] sm:$0xf]
        %v272 = vld [vmem:[%s236 + $0x50] sm:$0xf]
        %v273 = vld [vmem:[%s236 + $0x54] sm:$0xf]
        %v274 = vld [vmem:[%s236 + $0x58] sm:$0xf]
        %v275 = vld [vmem:[%s236 + $0x5c] sm:$0xf]
        %v276 = vld [vmem:[%s236 + $0x60] sm:$0xf]
        %v277 = vld [vmem:[%s236 + $0x64] sm:$0xf]
        %v278 = vld [vmem:[%s236 + $0x68] sm:$0xf]
        %v279 = vld [vmem:[%s236 + $0x6c] sm:$0xf]
        %v280 = vld [vmem:[%s236 + $0x70] sm:$0xf]
        %v281 = vld [vmem:[%s236 + $0x74] sm:$0xf]
        %v282 = vld [vmem:[%s236 + $0x78] sm:$0xf]
        %v283 = vld [vmem:[%s236 + $0x7c] sm:$0xf]
        %v284 = vld [vmem:[%s245] sm:$0xf]
        %v285 = vld [vmem:[%s245 + $0x4] sm:$0xf]
        %v286 = vld [vmem:[%s245 + $0x8] sm:$0xf]
        %v287 = vld [vmem:[%s245 + $0xc] sm:$0xf]
        %v288 = vld [vmem:[%s249] sm:$0x1]
        %v290 = vlaneseq
        %v291 = vshrl.u32 %v290, 7
        %v292 = vsub.s32 0, %v291
        %v293 = vrot.slane %v288, %v292
        %v327 = vunpack.c.l.b16 %v252
        %v328 = vunpack.c.l.b16 %v253
        %v329 = vunpack.c.l.b16 %v254
        %v330 = vunpack.c.l.b16 %v255
        %v331 = vunpack.c.l.b16 %v256
        %v332 = vunpack.c.l.b16 %v257
        %v333 = vunpack.c.l.b16 %v258
        %v334 = vunpack.c.l.b16 %v259
        %v335 = vunpack.c.l.b16 %v260
        %v336 = vunpack.c.l.b16 %v261
        %v337 = vunpack.c.l.b16 %v262
        %v338 = vunpack.c.l.b16 %v263
        %v339 = vunpack.c.l.b16 %v264
        %v340 = vunpack.c.l.b16 %v265
        %v341 = vunpack.c.l.b16 %v266
        %v342 = vunpack.c.l.b16 %v267
        %v343 = vunpack.c.l.b16 %v268
        %v344 = vunpack.c.l.b16 %v269
        %v345 = vunpack.c.l.b16 %v270
        %v346 = vunpack.c.l.b16 %v271
        %v347 = vunpack.c.l.b16 %v272
        %v348 = vunpack.c.l.b16 %v273
        %v349 = vunpack.c.l.b16 %v274
        %v350 = vunpack.c.l.b16 %v275
        %v351 = vunpack.c.l.b16 %v276
        %v352 = vunpack.c.l.b16 %v277
        %v353 = vunpack.c.l.b16 %v278
        %v354 = vunpack.c.l.b16 %v279
        %v355 = vunpack.c.l.b16 %v280
        %v356 = vunpack.c.l.b16 %v281
        %v357 = vunpack.c.l.b16 %v282
        %v358 = vunpack.c.l.b16 %v283
        %v359 = vpack.c.b16 %v328, %v327
        %v360 = vpack.c.b16 %v330, %v329
        %v361 = vpack.c.b16 %v332, %v331
        %v362 = vpack.c.b16 %v334, %v333
        %v363 = vpack.c.b16 %v336, %v335
        %v364 = vpack.c.b16 %v338, %v337
        %v365 = vpack.c.b16 %v340, %v339
        %v366 = vpack.c.b16 %v342, %v341
        %v367 = vpack.c.b16 %v344, %v343
        %v368 = vpack.c.b16 %v346, %v345
        %v369 = vpack.c.b16 %v348, %v347
        %v370 = vpack.c.b16 %v350, %v349
        %v371 = vpack.c.b16 %v352, %v351
        %v372 = vpack.c.b16 %v354, %v353
        %v373 = vpack.c.b16 %v356, %v355
        %v374 = vpack.c.b16 %v358, %v357
        %v379 = vunpack.c.l.b16 %v284
        %v380 = vunpack.c.l.b16 %v285
        %v381 = vunpack.c.l.b16 %v286
        %v382 = vunpack.c.l.b16 %v287
        %v383 = vpack.c.b16 %v380, %v379
        %v384 = vpack.c.b16 %v382, %v381
        %vm387 = vcmask 261120
        %v389 = vsel %vm387, %v359, 0
        %v392 = vsel %vm387, %v360, 0
        %v395 = vsel %vm387, %v361, 0
        %v398 = vsel %vm387, %v362, 0
        %v401 = vsel %vm387, %v363, 0
        %v404 = vsel %vm387, %v364, 0
        %v407 = vsel %vm387, %v365, 0
        %v410 = vsel %vm387, %v366, 0
        %v413 = vsel %vm387, %v367, 0
        %v416 = vsel %vm387, %v368, 0
        %v419 = vsel %vm387, %v369, 0
        %v422 = vsel %vm387, %v370, 0
        %v425 = vsel %vm387, %v371, 0
        %v428 = vsel %vm387, %v372, 0
        %v431 = vsel %vm387, %v373, 0
        %v434 = vsel %vm387, %v374, 0
        %436 = vmatprep.subr.bf16.mxu0 0
        %437 = vmatpush1.bf16.msra.mxu0 %v383
        %438 = vmatprep.subr.bf16.mxu0 0
        %439 = vmatpush1.bf16.msra.mxu0 %v384
        %440 = vmatprep.subr.bf16.mxu0 0
        %441 = vmatpush1.bf16.msra.mxu0 0
        %442 = vmatprep.subr.bf16.mxu0 0
        %443 = vmatpush1.bf16.msra.mxu0 0
        %444 = vmatprep.subr.bf16.mxu0 0
        %445 = vmatpush1.bf16.msra.mxu0 0
        %446 = vmatprep.subr.bf16.mxu0 0
        %447 = vmatpush1.bf16.msra.mxu0 0
        %448 = vmatprep.subr.bf16.mxu0 0
        %449 = vmatpush1.bf16.msra.mxu0 0
        %450 = vmatprep.subr.bf16.mxu0 0
        %451 = vmatpush1.bf16.msra.mxu0 0
        %452 = vmatprep.subr.bf16.mxu0 0
        %453 = vmatpush1.bf16.msra.mxu0 0
        %454 = vmatprep.subr.bf16.mxu0 0
        %455 = vmatpush1.bf16.msra.mxu0 0
        %456 = vmatprep.subr.bf16.mxu0 0
        %457 = vmatpush1.bf16.msra.mxu0 0
        %458 = vmatprep.subr.bf16.mxu0 0
        %459 = vmatpush1.bf16.msra.mxu0 0
        %460 = vmatprep.subr.bf16.mxu0 0
        %461 = vmatpush1.bf16.msra.mxu0 0
        %462 = vmatprep.subr.bf16.mxu0 0
        %463 = vmatpush1.bf16.msra.mxu0 0
        %464 = vmatprep.subr.bf16.mxu0 0
        %465 = vmatpush1.bf16.msra.mxu0 0
        %466 = vmatprep.subr.bf16.mxu0 0
        %467 = vmatpush1.bf16.msra.mxu0 0
        %468 = vmatprep.mubr.bf16.mxu0 0
        %469 = vmatmul.mubr.bf16.gmra.mrb[0].mxu0 %v389
        %v470 = vpop.f32.mrb[0].mxu0
        %v471 = vadd.f32 %v293, %v470
        %v472 = vpop.f32.mrb[0].mxu0
        %v473 = vpop.f32.mrb[0].mxu0
        %v474 = vadd.f32 %v293, %v473
        %v475 = vpop.f32.mrb[0].mxu0
        %476 = vmatprep.mubr.bf16.mxu0 0
        %477 = vmatmul.mubr.bf16.gmra.mrb[0].mxu0 %v392
        %v478 = vpop.f32.mrb[0].mxu0
        %v479 = vadd.f32 %v293, %v478
        %v480 = vpop.f32.mrb[0].mxu0
        %v481 = vpop.f32.mrb[0].mxu0
        %v482 = vadd.f32 %v293, %v481
        %v483 = vpop.f32.mrb[0].mxu0
        %484 = vmatprep.mubr.bf16.mxu0 0
        %485 = vmatmul.mubr.bf16.gmra.mrb[0].mxu0 %v395
        %v486 = vpop.f32.mrb[0].mxu0
        %v487 = vadd.f32 %v293, %v486
        %v488 = vpop.f32.mrb[0].mxu0
        %v489 = vpop.f32.mrb[0].mxu0
        %v490 = vadd.f32 %v293, %v489
        %v491 = vpop.f32.mrb[0].mxu0
        %492 = vmatprep.mubr.bf16.mxu0 0
        %493 = vmatmul.mubr.bf16.gmra.mrb[0].mxu0 %v398
        %v494 = vpop.f32.mrb[0].mxu0
        %v495 = vadd.f32 %v293, %v494
        %v496 = vpop.f32.mrb[0].mxu0
        %v497 = vpop.f32.mrb[0].mxu0
        %v498 = vadd.f32 %v293, %v497
        %v499 = vpop.f32.mrb[0].mxu0
        %500 = vmatprep.mubr.bf16.mxu0 0
        %501 = vmatmul.mubr.bf16.gmra.mrb[0].mxu0 %v401
        %v502 = vpop.f32.mrb[0].mxu0
        %v503 = vadd.f32 %v293, %v502
        %v504 = vpop.f32.mrb[0].mxu0
        %v505 = vpop.f32.mrb[0].mxu0
        %v506 = vadd.f32 %v293, %v505
        %v507 = vpop.f32.mrb[0].mxu0
        %508 = vmatprep.mubr.bf16.mxu0 0
        %509 = vmatmul.mubr.bf16.gmra.mrb[0].mxu0 %v404
        %v510 = vpop.f32.mrb[0].mxu0
        %v511 = vadd.f32 %v293, %v510
        %v512 = vpop.f32.mrb[0].mxu0
        %v513 = vpop.f32.mrb[0].mxu0
        %v514 = vadd.f32 %v293, %v513
        %v515 = vpop.f32.mrb[0].mxu0
        %516 = vmatprep.mubr.bf16.mxu0 0
        %517 = vmatmul.mubr.bf16.gmra.mrb[0].mxu0 %v407
        %v518 = vpop.f32.mrb[0].mxu0
        %v519 = vadd.f32 %v293, %v518
        %v520 = vpop.f32.mrb[0].mxu0
        %v521 = vpop.f32.mrb[0].mxu0
        %v522 = vadd.f32 %v293, %v521
        %v523 = vpop.f32.mrb[0].mxu0
        %524 = vmatprep.mubr.bf16.mxu0 0
        %525 = vmatmul.mubr.bf16.gmra.mrb[0].mxu0 %v410
        %v526 = vpop.f32.mrb[0].mxu0
        %v527 = vadd.f32 %v293, %v526
        %v528 = vpop.f32.mrb[0].mxu0
        %v529 = vpop.f32.mrb[0].mxu0
        %v530 = vadd.f32 %v293, %v529
        %v531 = vpop.f32.mrb[0].mxu0
        %532 = vmatprep.mubr.bf16.mxu0 0
        %533 = vmatmul.mubr.bf16.gmra.mrb[0].mxu0 %v413
        %v534 = vpop.f32.mrb[0].mxu0
        %v535 = vadd.f32 %v293, %v534
        %v536 = vpop.f32.mrb[0].mxu0
        %v537 = vpop.f32.mrb[0].mxu0
        %v538 = vadd.f32 %v293, %v537
        %v539 = vpop.f32.mrb[0].mxu0
        %540 = vmatprep.mubr.bf16.mxu0 0
        %541 = vmatmul.mubr.bf16.gmra.mrb[0].mxu0 %v416
        %v542 = vpop.f32.mrb[0].mxu0
        %v543 = vadd.f32 %v293, %v542
        %v544 = vpop.f32.mrb[0].mxu0
        %v545 = vpop.f32.mrb[0].mxu0
        %v546 = vadd.f32 %v293, %v545
        %v547 = vpop.f32.mrb[0].mxu0
        %548 = vmatprep.mubr.bf16.mxu0 0
        %549 = vmatmul.mubr.bf16.gmra.mrb[0].mxu0 %v419
        %v550 = vpop.f32.mrb[0].mxu0
        %v551 = vadd.f32 %v293, %v550
        %v552 = vpop.f32.mrb[0].mxu0
        %v553 = vpop.f32.mrb[0].mxu0
        %v554 = vadd.f32 %v293, %v553
        %v555 = vpop.f32.mrb[0].mxu0
        %556 = vmatprep.mubr.bf16.mxu0 0
        %557 = vmatmul.mubr.bf16.gmra.mrb[0].mxu0 %v422
        %v558 = vpop.f32.mrb[0].mxu0
        %v559 = vadd.f32 %v293, %v558
        %v560 = vpop.f32.mrb[0].mxu0
        %v561 = vpop.f32.mrb[0].mxu0
        %v562 = vadd.f32 %v293, %v561
        %v563 = vpop.f32.mrb[0].mxu0
        %564 = vmatprep.mubr.bf16.mxu0 0
        %565 = vmatmul.mubr.bf16.gmra.mrb[0].mxu0 %v425
        %v566 = vpop.f32.mrb[0].mxu0
        %v567 = vadd.f32 %v293, %v566
        %v568 = vpop.f32.mrb[0].mxu0
        %v569 = vpop.f32.mrb[0].mxu0
        %v570 = vadd.f32 %v293, %v569
        %v571 = vpop.f32.mrb[0].mxu0
        %572 = vmatprep.mubr.bf16.mxu0 0
        %573 = vmatmul.mubr.bf16.gmra.mrb[0].mxu0 %v428
        %v574 = vpop.f32.mrb[0].mxu0
        %v575 = vadd.f32 %v293, %v574
        %v576 = vpop.f32.mrb[0].mxu0
        %v577 = vpop.f32.mrb[0].mxu0
        %v578 = vadd.f32 %v293, %v577
        %v579 = vpop.f32.mrb[0].mxu0
        %580 = vmatprep.mubr.bf16.mxu0 0
        %581 = vmatmul.mubr.bf16.gmra.mrb[0].mxu0 %v431
        %v582 = vpop.f32.mrb[0].mxu0
        %v583 = vadd.f32 %v293, %v582
        %v584 = vpop.f32.mrb[0].mxu0
        %v585 = vpop.f32.mrb[0].mxu0
        %v586 = vadd.f32 %v293, %v585
        %v587 = vpop.f32.mrb[0].mxu0
        %588 = vmatprep.mubr.bf16.mxu0 0
        %589 = vmatmul.mubr.bf16.gmra.mrb[0].mxu0 %v434
        %v590 = vpop.f32.mrb[0].mxu0
        %v591 = vadd.f32 %v293, %v590
        %v592 = vpop.f32.mrb[0].mxu0
        %v593 = vpop.f32.mrb[0].mxu0
        %v594 = vadd.f32 %v293, %v593
        %v595 = vpop.f32.mrb[0].mxu0
        %596 = vdwg.mxu0
        %vm597 = vcmp.gt.f32.partialorder %v471, 0.0
        %vm598 = vcmp.gt.f32.partialorder %v474, 0.0
        %vm599 = vcmp.gt.f32.partialorder %v479, 0.0
        %vm600 = vcmp.gt.f32.partialorder %v482, 0.0
        %vm601 = vcmp.gt.f32.partialorder %v487, 0.0
        %vm602 = vcmp.gt.f32.partialorder %v490, 0.0
        %vm603 = vcmp.gt.f32.partialorder %v495, 0.0
        %vm604 = vcmp.gt.f32.partialorder %v498, 0.0
        %vm605 = vcmp.gt.f32.partialorder %v503, 0.0
        %vm606 = vcmp.gt.f32.partialorder %v506, 0.0
        %vm607 = vcmp.gt.f32.partialorder %v511, 0.0
        %vm608 = vcmp.gt.f32.partialorder %v514, 0.0
        %vm609 = vcmp.gt.f32.partialorder %v519, 0.0
        %vm610 = vcmp.gt.f32.partialorder %v522, 0.0
        %vm611 = vcmp.gt.f32.partialorder %v527, 0.0
        %vm612 = vcmp.gt.f32.partialorder %v530, 0.0
        %vm613 = vcmp.gt.f32.partialorder %v535, 0.0
        %vm614 = vcmp.gt.f32.partialorder %v538, 0.0
        %vm615 = vcmp.gt.f32.partialorder %v543, 0.0
        %vm616 = vcmp.gt.f32.partialorder %v546, 0.0
        %vm617 = vcmp.gt.f32.partialorder %v551, 0.0
        %vm618 = vcmp.gt.f32.partialorder %v554, 0.0
        %vm619 = vcmp.gt.f32.partialorder %v559, 0.0
        %vm620 = vcmp.gt.f32.partialorder %v562, 0.0
        %vm621 = vcmp.gt.f32.partialorder %v567, 0.0
        %vm622 = vcmp.gt.f32.partialorder %v570, 0.0
        %vm623 = vcmp.gt.f32.partialorder %v575, 0.0
        %vm624 = vcmp.gt.f32.partialorder %v578, 0.0
        %vm625 = vcmp.gt.f32.partialorder %v583, 0.0
        %vm626 = vcmp.gt.f32.partialorder %v586, 0.0
        %vm627 = vcmp.gt.f32.partialorder %v591, 0.0
        %vm628 = vcmp.gt.f32.partialorder %v594, 0.0
        %v629 = vmul.f32 %v471, 0.1
        %v630 = vmul.f32 %v474, 0.1
        %v631 = vmul.f32 %v479, 0.1
        %v632 = vmul.f32 %v482, 0.1
        %v633 = vmul.f32 %v487, 0.1
        %v634 = vmul.f32 %v490, 0.1
        %v635 = vmul.f32 %v495, 0.1
        %v636 = vmul.f32 %v498, 0.1
        %v637 = vmul.f32 %v503, 0.1
        %v638 = vmul.f32 %v506, 0.1
        %v639 = vmul.f32 %v511, 0.1
        %v640 = vmul.f32 %v514, 0.1
        %v641 = vmul.f32 %v519, 0.1
        %v642 = vmul.f32 %v522, 0.1
        %v643 = vmul.f32 %v527, 0.1
        %v644 = vmul.f32 %v530, 0.1
        %v645 = vmul.f32 %v535, 0.1
        %v646 = vmul.f32 %v538, 0.1
        %v647 = vmul.f32 %v543, 0.1
        %v648 = vmul.f32 %v546, 0.1
        %v649 = vmul.f32 %v551, 0.1
        %v650 = vmul.f32 %v554, 0.1
        %v651 = vmul.f32 %v559, 0.1
        %v652 = vmul.f32 %v562, 0.1
        %v653 = vmul.f32 %v567, 0.1
        %v654 = vmul.f32 %v570, 0.1
        %v655 = vmul.f32 %v575, 0.1
        %v656 = vmul.f32 %v578, 0.1
        %v657 = vmul.f32 %v583, 0.1
        %v658 = vmul.f32 %v586, 0.1
        %v659 = vmul.f32 %v591, 0.1
        %v660 = vmul.f32 %v594, 0.1
        %v661 = vsel %vm597, %v471, %v629
        %v662 = vsel %vm598, %v474, %v630
        %v663 = vsel %vm599, %v479, %v631
        %v664 = vsel %vm600, %v482, %v632
        %v665 = vsel %vm601, %v487, %v633
        %v666 = vsel %vm602, %v490, %v634
        %v667 = vsel %vm603, %v495, %v635
        %v668 = vsel %vm604, %v498, %v636
        %v669 = vsel %vm605, %v503, %v637
        %v670 = vsel %vm606, %v506, %v638
        %v671 = vsel %vm607, %v511, %v639
        %v672 = vsel %vm608, %v514, %v640
        %v673 = vsel %vm609, %v519, %v641
        %v674 = vsel %vm610, %v522, %v642
        %v675 = vsel %vm611, %v527, %v643
        %v676 = vsel %vm612, %v530, %v644
        %v677 = vsel %vm613, %v535, %v645
        %v678 = vsel %vm614, %v538, %v646
        %v679 = vsel %vm615, %v543, %v647
        %v680 = vsel %vm616, %v546, %v648
        %v681 = vsel %vm617, %v551, %v649
        %v682 = vsel %vm618, %v554, %v650
        %v683 = vsel %vm619, %v559, %v651
        %v684 = vsel %vm620, %v562, %v652
        %v685 = vsel %vm621, %v567, %v653
        %v686 = vsel %vm622, %v570, %v654
        %v687 = vsel %vm623, %v575, %v655
        %v688 = vsel %vm624, %v578, %v656
        %v689 = vsel %vm625, %v583, %v657
        %v690 = vsel %vm626, %v586, %v658
        %v691 = vsel %vm627, %v591, %v659
        %v692 = vsel %vm628, %v594, %v660
        %693 = vst [vmem:[%s228] sm:$0xff] %v661
        %694 = vst [vmem:[%s228 + $0x8] sm:$0xff] %v662
        %695 = vst [vmem:[%s228 + $0x10] sm:$0xff] %v663
        %696 = vst [vmem:[%s228 + $0x18] sm:$0xff] %v664
        %697 = vst [vmem:[%s228 + $0x20] sm:$0xff] %v665
        %698 = vst [vmem:[%s228 + $0x28] sm:$0xff] %v666
        %699 = vst [vmem:[%s228 + $0x30] sm:$0xff] %v667
        %700 = vst [vmem:[%s228 + $0x38] sm:$0xff] %v668
        %701 = vst [vmem:[%s228 + $0x40] sm:$0xff] %v669
        %702 = vst [vmem:[%s228 + $0x48] sm:$0xff] %v670
        %703 = vst [vmem:[%s228 + $0x50] sm:$0xff] %v671
        %704 = vst [vmem:[%s228 + $0x58] sm:$0xff] %v672
        %705 = vst [vmem:[%s228 + $0x60] sm:$0xff] %v673
        %706 = vst [vmem:[%s228 + $0x68] sm:$0xff] %v674
        %707 = vst [vmem:[%s228 + $0x70] sm:$0xff] %v675
        %708 = vst [vmem:[%s228 + $0x78] sm:$0xff] %v676
        %709 = vst [vmem:[%s228 + $0x80] sm:$0xff] %v677
        %710 = vst [vmem:[%s228 + $0x88] sm:$0xff] %v678
        %711 = vst [vmem:[%s228 + $0x90] sm:$0xff] %v679
        %712 = vst [vmem:[%s228 + $0x98] sm:$0xff] %v680
        %713 = vst [vmem:[%s228 + $0xa0] sm:$0xff] %v681
        %714 = vst [vmem:[%s228 + $0xa8] sm:$0xff] %v682
        %715 = vst [vmem:[%s228 + $0xb0] sm:$0xff] %v683
        %716 = vst [vmem:[%s228 + $0xb8] sm:$0xff] %v684
        %717 = vst [vmem:[%s228 + $0xc0] sm:$0xff] %v685
        %718 = vst [vmem:[%s228 + $0xc8] sm:$0xff] %v686
        %719 = vst [vmem:[%s228 + $0xd0] sm:$0xff] %v687
        %720 = vst [vmem:[%s228 + $0xd8] sm:$0xff] %v688
        %721 = vst [vmem:[%s228 + $0xe0] sm:$0xff] %v689
        %722 = vst [vmem:[%s228 + $0xe8] sm:$0xff] %v690
        %723 = vst [vmem:[%s228 + $0xf0] sm:$0xff] %v691
        %724 = vst [vmem:[%s228 + $0xf8] sm:$0xff] %v692
        %s725 = sand.u32 %s128, 1
        %s726 = scalar_lea.sflag [#allocation3], %s725
        %s727 = sand.u32 %s128, 1
        %s728 = smul.addr %s727, 256
        %s729 = scalar_lea.vmem [#allocation2], %s728
        // Predicated region
        $region33: #{conv2d_bn_act.1} parent=31 // pred_check
          %p730 = pneg %p138
        $region34: #{conv2d_bn_act.1} parent=31 // pred_check_branch
          %732 = sbr.rel (%p730) target = $region36
        $region35: #{conv2d_bn_act.1} parent=31 // pred_region
          %s733 = smul.u32 32, %s22
          %s735 = ssub.s32 4096, 4096
          %736 = vsyncadd %s726, %s735
          %s737 = sadd.s32 %s23, %s733
          %s738 = smul.addr %s737, 128
          %s739 = scalar_lea.hbm %s3, %s738
          %s740 = sshll.u32 %s729, 4
          %s741 = int_to_ptr.vmem [resolvable:$true] %s740
          %746 = dma.vmem_to_hbm [thread:$0]  %s741, 4096, %s739, %s726, 128, 128, 8
        $region36: #{conv2d_bn_act.1} parent=31 // pred_fallthru
          _
      $region32: #{conv2d_bn_act.1} parent=5 // pred_fallthru
        _
      %p747 = scmp.le.s32.totalorder 2, %s12
      // Predicated region
      $region37: #{conv2d_bn_act.1} parent=5 // pred_check
        %p748 = pneg %p747
      $region38: #{conv2d_bn_act.1} parent=5 // pred_check_branch
        %750 = sbr.rel (%p748) target = $region40
      $region39: #{conv2d_bn_act.1} parent=5 // pred_region
        %s751 = ssub.s32 %s12, 2
        // Predicated region
        $region41: #{conv2d_bn_act.1} parent=39 // pred_check
          %p752 = pneg %p144
        $region42: #{conv2d_bn_act.1} parent=39 // pred_check_branch
          %754 = sbr.rel (%p752) target = $region44
        $region43: #{conv2d_bn_act.1} parent=39 // pred_region
          %s755 = sand.u32 %s129, 1
          %s756 = scalar_lea.sflag [#allocation3], %s755
          %s757 = sand.u32 %s129, 1
          %s758 = smul.addr %s757, 256
          %s759 = scalar_lea.vmem [#allocation2], %s758
          %760 = dma.done %s756, 4096
        $region44: #{conv2d_bn_act.1} parent=39 // pred_fallthru
          _
      $region40: #{conv2d_bn_act.1} parent=5 // pred_fallthru
        _
    $region6: #{conv2d_bn_act.1} parent=1 // loop_footer
      %s16 = sadd.s32 1, %s12
    $region7: #{conv2d_bn_act.1} parent=1 // loop_footer_branch
      %11 = sbr.rel target = $region3
    $region8: #{conv2d_bn_act.1} parent=1 // loop_exit
      _
    %761 = vsyncpa [#allocation3], 1
    %s762 = scalar_lea.sflag [#allocation3], 1
    %763 = vsyncpa %s762, 1

</llo_original>
